<compile_context>
chip_gen: v6e
topology: v6e:2x2x1
jax: 0.10.0
libtpu: 0.0.40
codegen_flags: <defaults>
</compile_context>

<pallas_src>
import functools

import jax
import jax.numpy as jnp
from jax.experimental import pallas as pl
from jax.experimental.pallas import tpu as pltpu

_BN_EPS = 1e-5


def _round_up(x, m):
    return ((x + m - 1) // m) * m


# ----------------------------- Pallas kernels ------------------------------

def _fused_gemm_kernel(*refs, relu, has_idn):
    """out = act((A @ B) * scale + shift [+ idn]) for one (tm, tn) output tile."""
    if has_idn:
        a_ref, b_ref, s_ref, t_ref, r_ref, o_ref = refs
    else:
        a_ref, b_ref, s_ref, t_ref, o_ref = refs
    acc = jnp.dot(a_ref[...], b_ref[...], preferred_element_type=jnp.float32)
    y = acc * s_ref[...] + t_ref[...]
    if has_idn:
        y = y + r_ref[...]
    if relu:
        y = jnp.maximum(y, 0.0)
    o_ref[...] = y


def fused_matmul(a, b, scale, shift, residual=None, *, relu=False):
    """a:(M,K) bf16, b:(K,N) bf16, scale/shift:(N,) f32, residual:(M,N) f32 or None."""
    M, K = a.shape
    _, N = b.shape
    tm = min(128, _round_up(M, 8))          # don't pad tiny FPN-head GEMMs to 128 rows
    Mp = _round_up(M, tm)
    Np = _round_up(N, 128)                  # lane-dense (>=128) output tiles
    tn = 256 if (Np % 256 == 0) else 128    # fewer grid steps for wide outputs

    a_p = jnp.pad(a, ((0, Mp - M), (0, 0)))
    b_p = jnp.pad(b, ((0, 0), (0, Np - N)))
    s_p = jnp.pad(scale.reshape(1, N).astype(jnp.float32), ((0, 0), (0, Np - N)))
    t_p = jnp.pad(shift.reshape(1, N).astype(jnp.float32), ((0, 0), (0, Np - N)))

    has_idn = residual is not None
    args = [a_p, b_p, s_p, t_p]
    in_specs = [
        pl.BlockSpec((tm, K), lambda i, j: (i, 0)),
        pl.BlockSpec((K, tn), lambda i, j: (0, j)),
        pl.BlockSpec((1, tn), lambda i, j: (0, j)),
        pl.BlockSpec((1, tn), lambda i, j: (0, j)),
    ]
    if has_idn:
        r_p = jnp.pad(residual.astype(jnp.float32), ((0, Mp - M), (0, Np - N)))
        args.append(r_p)
        in_specs.append(pl.BlockSpec((tm, tn), lambda i, j: (i, j)))

    out = pl.pallas_call(
        functools.partial(_fused_gemm_kernel, relu=relu, has_idn=has_idn),
        out_shape=jax.ShapeDtypeStruct((Mp, Np), jnp.float32),
        grid=(Mp // tm, Np // tn),
        in_specs=in_specs,
        out_specs=pl.BlockSpec((tm, tn), lambda i, j: (i, j)),
        compiler_params=pltpu.CompilerParams(
            dimension_semantics=("parallel", "parallel"),
            vmem_limit_bytes=32 * 1024 * 1024),
    )(*args)
    return out[:M, :N]


def _maxpool3_kernel(x_ref, o_ref):
    x = x_ref[...]                          # (Hp, Wp, C)
    Ho, Wo = o_ref.shape[0], o_ref.shape[1]
    # separable 3x3 max: rows first, then columns (4 vmax ops instead of 8)
    r = jnp.maximum(jnp.maximum(x[0:Ho, :, :], x[1:1 + Ho, :, :]), x[2:2 + Ho, :, :])
    o_ref[...] = jnp.maximum(jnp.maximum(r[:, 0:Wo, :], r[:, 1:1 + Wo, :]),
                             r[:, 2:2 + Wo, :])


def maxpool3x3_s2_p1(x):
    """PyTorch MaxPool2d(kernel_size=3, stride=2, padding=1) on NHWC."""
    N, H, W, C = x.shape
    xp = jnp.pad(x, ((0, 0), (1, 1), (1, 1), (0, 0)), constant_values=-jnp.inf)
    Hp, Wp = H + 2, W + 2
    Ho1, Wo1 = Hp - 2, Wp - 2               # stride-1 3x3 max, subsample afterwards
    out = pl.pallas_call(
        _maxpool3_kernel,
        out_shape=jax.ShapeDtypeStruct((N, Ho1, Wo1, C), jnp.float32),
        grid=(N,),
        in_specs=[pl.BlockSpec((None, Hp, Wp, C), lambda n: (n, 0, 0, 0))],
        out_specs=pl.BlockSpec((None, Ho1, Wo1, C), lambda n: (n, 0, 0, 0)),
        compiler_params=pltpu.CompilerParams(dimension_semantics=("parallel",)),
    )(xp)
    return out[:, ::2, ::2, :]


# --------------------------------- glue ------------------------------------

def conv_bn_act(x, w, scale=None, shift=None, *, stride=1, pad=0, relu=False,
                residual=None):
    """NHWC conv (PyTorch OIHW weight) -> im2col + single fused Pallas GEMM whose
    epilogue applies per-channel BN scale/shift, optional residual add and ReLU."""
    Cout, Cin, kh, kw = w.shape
    xp = jnp.pad(x, ((0, 0), (pad, pad), (pad, pad), (0, 0))) if pad else x
    N, Hp, Wp, _ = xp.shape
    Ho = (Hp - kh) // stride + 1
    Wo = (Wp - kw) // stride + 1
    cols = [xp[:, i:i + stride * (Ho - 1) + 1:stride,
               j:j + stride * (Wo - 1) + 1:stride, :]
            for i in range(kh) for j in range(kw)]
    patches = (cols[0] if len(cols) == 1 else jnp.concatenate(cols, axis=-1))
    patches = patches.reshape(N * Ho * Wo, kh * kw * Cin).astype(jnp.bfloat16)
    wm = jnp.transpose(w, (2, 3, 1, 0)).reshape(kh * kw * Cin, Cout).astype(jnp.bfloat16)
    if scale is None:
        scale = jnp.ones((Cout,), jnp.float32)
    if shift is None:
        shift = jnp.zeros((Cout,), jnp.float32)
    res = None if residual is None else residual.reshape(N * Ho * Wo, Cout)
    out = fused_matmul(patches, wm, scale, shift, res, relu=relu)
    return out.reshape(N, Ho, Wo, Cout)


def bn_scale_shift(bnp):
    # eval-mode BatchNorm2d folded to per-channel affine (running stats frozen at init)
    scale = bnp["gamma"] * jax.lax.rsqrt(bnp["var"] + _BN_EPS)
    shift = bnp["beta"] - bnp["mean"] * scale
    return scale, shift


def upsample_nearest(x, out_h, out_w):
    # matches F.interpolate(mode='nearest'): src_idx = floor(dst_idx * in/out)
    N, H, W, C = x.shape
    rows = (jnp.arange(out_h) * H) // out_h
    cols = (jnp.arange(out_w) * W) // out_w
    return x[:, rows][:, :, cols]


# ------------------------------ parameters ---------------------------------

def _kaiming_uniform(key, cout, cin, kh, kw):
    fan_in = cin * kh * kw
    bound = (3.0 / fan_in) ** 0.5           # kaiming_uniform_ with a=1
    return jax.random.uniform(key, (cout, cin, kh, kw), jnp.float32, -bound, bound)


def _bn_params(c):
    return dict(gamma=jnp.ones((c,), jnp.float32), beta=jnp.zeros((c,), jnp.float32),
                mean=jnp.zeros((c,), jnp.float32), var=jnp.ones((c,), jnp.float32))


def _basic_block_params(key, inplanes, planes, stride):
    k1, k2, k3 = jax.random.split(key, 3)
    p = dict(
        conv1_w=_kaiming_uniform(k1, planes, inplanes, 3, 3),
        bn1=_bn_params(planes),
        conv2_w=_kaiming_uniform(k2, planes, planes, 3, 3),
        bn2=_bn_params(planes),
        stride=stride,                      # python int (static)
    )
    if stride != 1 or inplanes != planes:   # BasicBlock expansion = 1
        p["down_w"] = _kaiming_uniform(k3, planes, inplanes, 1, 1)
        p["down_bn"] = _bn_params(planes)
    return p


def init_params(key, seq_len=1, layers=(1, 1, 1, 1)):
    keys = iter(jax.random.split(key, 40))
    params = {}
    params["conv1_w"] = _kaiming_uniform(next(keys), 64, 3 * seq_len, 7, 7)
    params["bn1"] = _bn_params(64)
    inplanes = 64
    for li, (planes, stride) in enumerate(zip((64, 128, 256, 512), (1, 2, 2, 2)), start=1):
        blocks = []
        for b in range(layers[li - 1]):
            s = stride if b == 0 else 1
            blocks.append(_basic_block_params(next(keys), inplanes, planes, s))
            inplanes = planes
        params[f"layer{li}"] = blocks
    params["conv6_w"] = _kaiming_uniform(next(keys), 256, 512, 3, 3)
    params["conv7_w"] = _kaiming_uniform(next(keys), 256, 256, 3, 3)
    params["lateral1_w"] = _kaiming_uniform(next(keys), 256, 512, 1, 1)
    params["lateral2_w"] = _kaiming_uniform(next(keys), 256, 256, 1, 1)
    params["lateral3_w"] = _kaiming_uniform(next(keys), 256, 128, 1, 1)
    params["lateral4_w"] = _kaiming_uniform(next(keys), 256, 64, 1, 1)
    for i in range(1, 5):
        params[f"corr{i}_w"] = _kaiming_uniform(next(keys), 256, 256, 3, 3)
    return params


# -------------------------------- forward ----------------------------------

def basic_block_forward(x, p):
    s1, t1 = bn_scale_shift(p["bn1"])
    s2, t2 = bn_scale_shift(p["bn2"])
    if "down_w" in p:
        sd, td = bn_scale_shift(p["down_bn"])
        idn = conv_bn_act(x, p["down_w"], sd, td, stride=p["stride"], pad=0, relu=False)
    else:
        idn = x
    out = conv_bn_act(x, p["conv1_w"], s1, t1, stride=p["stride"], pad=1, relu=True)
    # conv2 + BN2 + residual add + final ReLU in a single fused GEMM epilogue
    out = conv_bn_act(out, p["conv2_w"], s2, t2, stride=1, pad=1, relu=True, residual=idn)
    return out


def run_layer(x, blocks):
    for p in blocks:
        x = basic_block_forward(x, p)
    return x


def resnet_fpn_forward(params, x_nchw):
    x = jnp.transpose(x_nchw, (0, 2, 3, 1)).astype(jnp.float32)   # NCHW -> NHWC
    # _forward_input_layer: conv1+bn1+relu (fused) -> maxpool -> layer1
    s1, t1 = bn_scale_shift(params["bn1"])
    x = conv_bn_act(x, params["conv1_w"], s1, t1, stride=2, pad=3, relu=True)
    x = maxpool3x3_s2_p1(x)
    x = run_layer(x, params["layer1"])
    # forward(): layer1 is intentionally applied a *second* time, and layer2
    # consumes x (not c2) — exactly as in the reference module.
    c2 = run_layer(x, params["layer1"])
    c3 = run_layer(x, params["layer2"])
    c4 = run_layer(c3, params["layer3"])
    c5 = run_layer(c4, params["layer4"])

    p5 = conv_bn_act(c5, params["lateral1_w"])
    p5_up = upsample_nearest(p5, c4.shape[1], c4.shape[2])
    p5 = conv_bn_act(p5, params["corr1_w"], stride=1, pad=1)

    p4 = conv_bn_act(c4, params["lateral2_w"], residual=p5_up)    # add fused in epilogue
    p4_up = upsample_nearest(p4, c3.shape[1], c3.shape[2])
    p4 = conv_bn_act(p4, params["corr2_w"], stride=1, pad=1)

    p3 = conv_bn_act(c3, params["lateral3_w"], residual=p4_up)
    p3_up = upsample_nearest(p3, c2.shape[1], c2.shape[2])
    p3 = conv_bn_act(p3, params["corr3_w"], stride=1, pad=1)

    p2 = conv_bn_act(c2, params["lateral4_w"], residual=p3_up)
    p2 = conv_bn_act(p2, params["corr4_w"], stride=1, pad=1)

    p6 = conv_bn_act(c5, params["conv6_w"], stride=2, pad=1)
    # F.relu(p6) folded into conv7's im2col glue (elementwise, XLA-fused with patching)
    p7 = conv_bn_act(jnp.maximum(p6, 0.0), params["conv7_w"], stride=2, pad=1)

    outs = (p2, p3, p4, p5, p6, p7)
    return tuple(jnp.transpose(o, (0, 3, 1, 2)) for o in outs)    # back to NCHW


# ---------------------------------- main ------------------------------------

if __name__ == "__main__":
    key = jax.random.PRNGKey(0)
    pkey, xkey = jax.random.split(key)
    params = init_params(pkey, seq_len=1, layers=(1, 1, 1, 1))
    x = jax.random.normal(xkey, (2, 3, 32, 32), jnp.float32)      # NCHW like PyTorch

    # sanity check: fused Pallas conv (bf16 operands, f32 accum) vs XLA conv at the
    # same operand precision (first conv layer, scale=1 / shift=0 / no relu)
    ref = jax.lax.conv_general_dilated(
        x.astype(jnp.bfloat16), params["conv1_w"].astype(jnp.bfloat16),
        (2, 2), [(3, 3), (3, 3)],
        dimension_numbers=("NCHW", "OIHW", "NCHW"),
        preferred_element_type=jnp.float32)
    mine = jnp.transpose(
        conv_bn_act(jnp.transpose(x, (0, 2, 3, 1)), params["conv1_w"], stride=2, pad=3),
        (0, 3, 1, 2))
    assert jnp.allclose(ref, mine, atol=1e-2, rtol=1e-2), "conv kernel mismatch"

    fwd = jax.jit(lambda inp: resnet_fpn_forward(params, inp))
    outs = jax.block_until_ready(fwd(x))

    expected = [(2, 256, 8, 8), (2, 256, 4, 4), (2, 256, 2, 2),
                (2, 256, 1, 1), (2, 256, 1, 1), (2, 256, 1, 1)]
    assert [tuple(o.shape) for o in outs] == expected, [tuple(o.shape) for o in outs]
    assert all(jnp.all(jnp.isfinite(o)) for o in outs)
    print("KERNEL_OK")
</pallas_src>

<mosaic_0001>
module attributes {stable_mosaic.version = 11 : i64} {
  func.func @_fused_gemm_kernel(%arg0: i32, %arg1: i32, %arg2: memref<128x147xbf16, #tpu.memory_space<vmem>>, %arg3: memref<147x128xbf16, #tpu.memory_space<vmem>>, %arg4: memref<1x128xf32, #tpu.memory_space<vmem>>, %arg5: memref<1x128xf32, #tpu.memory_space<vmem>>, %arg6: memref<128x128xf32, #tpu.memory_space<vmem>>) attributes {dimension_semantics = [#tpu.dimension_semantics<parallel>, #tpu.dimension_semantics<parallel>], iteration_bounds = array<i64: 4, 1>, scalar_prefetch = 0 : i64, scratch_operands = 0 : i64, tpu.core_type = #tpu.core_type<tc>, window_params = [{transform_indices = @transform_0, window_bounds = array<i64: 128, 147>}, {transform_indices = @transform_1, window_bounds = array<i64: 147, 128>}, {transform_indices = @transform_2, window_bounds = array<i64: 1, 128>}, {transform_indices = @transform_3, window_bounds = array<i64: 1, 128>}, {transform_indices = @transform_4, window_bounds = array<i64: 128, 128>}]} {
    %c0 = arith.constant 0 : index
    %c0_0 = arith.constant 0 : index
    %0 = vector.load %arg2[%c0, %c0_0] : memref<128x147xbf16, #tpu.memory_space<vmem>>, vector<128x147xbf16>
    %c0_1 = arith.constant 0 : index
    %c0_2 = arith.constant 0 : index
    %1 = vector.load %arg3[%c0_1, %c0_2] : memref<147x128xbf16, #tpu.memory_space<vmem>>, vector<147x128xbf16>
    %cst = arith.constant dense<0.000000e+00> : vector<128x128xf32>
    %2 = tpu.matmul %0, %1, %cst {dimension_numbers = #tpu.dot_dimension_numbers<[1], [0], [0], [1], [0, 0, 1, 1], [], []>} : vector<128x147xbf16>, vector<147x128xbf16>, vector<128x128xf32> -> vector<128x128xf32>
    %c0_3 = arith.constant 0 : index
    %c0_4 = arith.constant 0 : index
    %3 = vector.load %arg4[%c0_3, %c0_4] : memref<1x128xf32, #tpu.memory_space<vmem>>, vector<1x128xf32>
    %4 = vector.broadcast %3 : vector<1x128xf32> to vector<128x128xf32>
    %5 = arith.mulf %2, %4 : vector<128x128xf32>
    %c0_5 = arith.constant 0 : index
    %c0_6 = arith.constant 0 : index
    %6 = vector.load %arg5[%c0_5, %c0_6] : memref<1x128xf32, #tpu.memory_space<vmem>>, vector<1x128xf32>
    %7 = vector.broadcast %6 : vector<1x128xf32> to vector<128x128xf32>
    %8 = arith.addf %5, %7 : vector<128x128xf32>
    %c0_7 = arith.constant 0 : index
    %c0_8 = arith.constant 0 : index
    %9 = vector.load %arg6[%c0_7, %c0_8] : memref<128x128xf32, #tpu.memory_space<vmem>>, vector<128x128xf32>
    tpu.vector_store %arg6[%c0_7, %c0_8], %8 {strides = array<i32>} : memref<128x128xf32, #tpu.memory_space<vmem>>, vector<128x128xf32>,
    return
  }
  func.func @transform_0(%arg0: i32, %arg1: i32) -> (i32, i32) {
    %c0_i32 = arith.constant 0 : i32
    %c0_i32_0 = arith.constant 0 : i32
    return %arg0, %c0_i32 : i32, i32
  }
  func.func @transform_1(%arg0: i32, %arg1: i32) -> (i32, i32) {
    %c0_i32 = arith.constant 0 : i32
    %c0_i32_0 = arith.constant 0 : i32
    return %c0_i32, %arg1 : i32, i32
  }
  func.func @transform_2(%arg0: i32, %arg1: i32) -> (i32, i32) {
    %c0_i32 = arith.constant 0 : i32
    %c0_i32_0 = arith.constant 0 : i32
    return %c0_i32, %arg1 : i32, i32
  }
  func.func @transform_3(%arg0: i32, %arg1: i32) -> (i32, i32) {
    %c0_i32 = arith.constant 0 : i32
    %c0_i32_0 = arith.constant 0 : i32
    return %c0_i32, %arg1 : i32, i32
  }
  func.func @transform_4(%arg0: i32, %arg1: i32) -> (i32, i32) {
    %c0_i32 = arith.constant 0 : i32
    return %arg0, %arg1 : i32, i32
  }
}

</mosaic_0001>

<llo_original>
// kernel: tpu_custom_call.1
$region0: #{tpu_custom_call.1}
  #allocation0 [shape = 'u32[]', space=smem, size = 0x4, offset = 0x4, fixed_abs, tag = 'smem constant byte address 0x4 - core index']
  #allocation1 [shape = 'u32[144,128]{1,0:T(1,128)}', space=vmem, size = 0x12000, scoped, tag = 'internal scratch']
  %s0 = inlined_call_operand.vmem [shape: bf16[512,147], index: 0, kind: input, shape index: {}]
  %s1 = inlined_call_operand.vmem [shape: bf16[147,128], index: 1, kind: input, shape index: {}]
  %s2 = inlined_call_operand.vmem [shape: f32[1,128], index: 2, kind: input, shape index: {}]
  %s3 = inlined_call_operand.vmem [shape: f32[1,128], index: 3, kind: input, shape index: {}]
  %s4 = inlined_call_operand.hbm [shape: f32[512,128], index: 4, kind: output, shape index: {}]
  %s5 = sld [smem:[#allocation0]]
  $region49: #{tpu_custom_call.1} parent=0
    _
  %s7 = ssub.s32 1, %s5
  %s8 = scalar_select 0, %s7, %s5
  $region1: #{tpu_custom_call.1} parent=0
    #allocation2 [shape = 'u8[131072]{0}', space=vmem, size = 0x20000, scoped, tag = 'output window, operand 0']
    #allocation3 [shape = 's32[2]{0}', space=sflag, size = 0x8, scoped, tag = 'scoped memory for tpu_custom_call.1']
    %9 = vsyncpa [#allocation3], 0
    %s10 = scalar_lea.sflag [#allocation3], 1
    %11 = vsyncpa %s10, 0
    loop: start=0, step=1, limit=6
    $region2: #{tpu_custom_call.1} parent=1 // loop_pre_header
      _
    $region3: #{tpu_custom_call.1} parent=1 // loop_header
      %s13 = sphi 0, %s17
      %p14 = scmp.ge.s32.totalorder %s13, 6
      %s20 = sphi 0, %s32
      %s21 = sphi 0, %s28
      %s22 = sphi 0, %s20
      %s23 = sphi 0, %s21
      %s24 = sphi 0, %s22
      %s25 = sphi 0, %s23
      %s35 = sphi 0, %s37
      %s38 = sphi 0, %s35
      %s39 = sphi 0, %s38
      %s55 = sphi 0, %s39
      %s61 = sphi 0, %s63
      %s64 = sphi 0, %s61
      %s65 = sphi 0, %s64
      %s81 = sphi 0, %s65
      %s87 = sphi 0, %s89
      %s90 = sphi 0, %s87
      %s91 = sphi 0, %s90
      %s107 = sphi 0, %s91
      %s113 = sphi 0, %s115
      %s116 = sphi 0, %s113
      %s117 = sphi 0, %s116
      %s133 = sphi 0, %s117
      %s141 = sphi 0, %s143
      %s144 = sphi 0, %s141
      %s145 = sphi 0, %s144
      %s161 = sphi 0, %s145
    $region4: #{tpu_custom_call.1} parent=1 // loop_header_branch
      %16 = sbr.rel (%p14) target = $region8
    $region5: #{tpu_custom_call.1} parent=1 // loop_body
      %s18 = ssub.s32 %s13, 1
      %s19 = ssub.s32 %s13, 2
      %s26 = sadd.s32 1, %s21
      %p27 = scmp.ge.s32.totalorder %s26, 1
      %s28 = scalar_select %p27, 0, %s26
      %s29 = sadd.s32 1, %s20
      %s30 = scalar_select %p27, %s29, %s20
      %p31 = scmp.ge.s32.totalorder %s30, 4
      %s32 = scalar_select %p31, 0, %s30
      %s33 = ssub.s32 %s20, %s32
      %p34 = scmp.eq.s32.totalorder %s33, 0
      %s36 = sadd.s32 %s35, 1
      %s37 = scalar_select %p34, %s35, %s36
      %p40 = pneg %p34
      %p41 = scmp.eq.s32.totalorder %s13, 3
      %p42 = por %p40, %p41
      %p43 = scmp.ne.s32.totalorder %s35, %s38
      %p44 = scmp.eq.s32.totalorder %s13, 0
      %p45 = por %p43, %p44
      %p46 = scmp.ne.s32.totalorder %s35, %s38
      %p47 = scmp.eq.s32.totalorder %s18, 3
      %p48 = por %p46, %p47
      %p49 = scmp.ne.s32.totalorder %s38, %s39
      %p50 = scmp.eq.s32.totalorder %s18, 0
      %p51 = por %p49, %p50
      %p52 = scmp.ne.s32.totalorder %s38, %s39
      %p53 = scmp.eq.s32.totalorder %s19, 3
      %p54 = por %p52, %p53
      %p56 = scmp.ne.s32.totalorder %s39, %s55
      %p57 = scmp.eq.s32.totalorder %s19, 0
      %p58 = por %p56, %p57
      %s59 = ssub.s32 %s21, %s28
      %p60 = scmp.eq.s32.totalorder %s59, 0
      %s62 = sadd.s32 %s61, 1
      %s63 = scalar_select %p60, %s61, %s62
      %p66 = pneg %p60
      %p67 = scmp.eq.s32.totalorder %s13, 3
      %p68 = por %p66, %p67
      %p69 = scmp.ne.s32.totalorder %s61, %s64
      %p70 = scmp.eq.s32.totalorder %s13, 0
      %p71 = por %p69, %p70
      %p72 = scmp.ne.s32.totalorder %s61, %s64
      %p73 = scmp.eq.s32.totalorder %s18, 3
      %p74 = por %p72, %p73
      %p75 = scmp.ne.s32.totalorder %s64, %s65
      %p76 = scmp.eq.s32.totalorder %s18, 0
      %p77 = por %p75, %p76
      %p78 = scmp.ne.s32.totalorder %s64, %s65
      %p79 = scmp.eq.s32.totalorder %s19, 3
      %p80 = por %p78, %p79
      %p82 = scmp.ne.s32.totalorder %s65, %s81
      %p83 = scmp.eq.s32.totalorder %s19, 0
      %p84 = por %p82, %p83
      %s85 = ssub.s32 %s21, %s28
      %p86 = scmp.eq.s32.totalorder %s85, 0
      %s88 = sadd.s32 %s87, 1
      %s89 = scalar_select %p86, %s87, %s88
      %p92 = pneg %p86
      %p93 = scmp.eq.s32.totalorder %s13, 3
      %p94 = por %p92, %p93
      %p95 = scmp.ne.s32.totalorder %s87, %s90
      %p96 = scmp.eq.s32.totalorder %s13, 0
      %p97 = por %p95, %p96
      %p98 = scmp.ne.s32.totalorder %s87, %s90
      %p99 = scmp.eq.s32.totalorder %s18, 3
      %p100 = por %p98, %p99
      %p101 = scmp.ne.s32.totalorder %s90, %s91
      %p102 = scmp.eq.s32.totalorder %s18, 0
      %p103 = por %p101, %p102
      %p104 = scmp.ne.s32.totalorder %s90, %s91
      %p105 = scmp.eq.s32.totalorder %s19, 3
      %p106 = por %p104, %p105
      %p108 = scmp.ne.s32.totalorder %s91, %s107
      %p109 = scmp.eq.s32.totalorder %s19, 0
      %p110 = por %p108, %p109
      %s111 = ssub.s32 %s21, %s28
      %p112 = scmp.eq.s32.totalorder %s111, 0
      %s114 = sadd.s32 %s113, 1
      %s115 = scalar_select %p112, %s113, %s114
      %p118 = pneg %p112
      %p119 = scmp.eq.s32.totalorder %s13, 3
      %p120 = por %p118, %p119
      %p121 = scmp.ne.s32.totalorder %s113, %s116
      %p122 = scmp.eq.s32.totalorder %s13, 0
      %p123 = por %p121, %p122
      %p124 = scmp.ne.s32.totalorder %s113, %s116
      %p125 = scmp.eq.s32.totalorder %s18, 3
      %p126 = por %p124, %p125
      %p127 = scmp.ne.s32.totalorder %s116, %s117
      %p128 = scmp.eq.s32.totalorder %s18, 0
      %p129 = por %p127, %p128
      %p130 = scmp.ne.s32.totalorder %s116, %s117
      %p131 = scmp.eq.s32.totalorder %s19, 3
      %p132 = por %p130, %p131
      %p134 = scmp.ne.s32.totalorder %s117, %s133
      %p135 = scmp.eq.s32.totalorder %s19, 0
      %p136 = por %p134, %p135
      %s137 = ssub.s32 %s20, %s32
      %s138 = ssub.s32 %s21, %s28
      %s139 = sor.u32 %s137, %s138
      %p140 = scmp.eq.s32.totalorder %s139, 0
      %s142 = sadd.s32 %s141, 1
      %s143 = scalar_select %p140, %s141, %s142
      %p146 = pneg %p140
      %p147 = scmp.eq.s32.totalorder %s13, 3
      %p148 = por %p146, %p147
      %p149 = scmp.ne.s32.totalorder %s141, %s144
      %p150 = scmp.eq.s32.totalorder %s13, 0
      %p151 = por %p149, %p150
      %p152 = scmp.ne.s32.totalorder %s141, %s144
      %p153 = scmp.eq.s32.totalorder %s18, 3
      %p154 = por %p152, %p153
      %p155 = scmp.ne.s32.totalorder %s144, %s145
      %p156 = scmp.eq.s32.totalorder %s18, 0
      %p157 = por %p155, %p156
      %p158 = scmp.ne.s32.totalorder %s144, %s145
      %p159 = scmp.eq.s32.totalorder %s19, 3
      %p160 = por %p158, %p159
      %p162 = scmp.ne.s32.totalorder %s145, %s161
      %p163 = scmp.eq.s32.totalorder %s19, 0
      %p164 = por %p162, %p163
      %p165 = scmp.le.s32.totalorder 1, %s13
      %p166 = scmp.lt.s32.totalorder %s13, 5
      %p167 = pnand %p165, %p166
      %p168 = pneg %p167
      // Predicated region
      $region9: #{tpu_custom_call.1} parent=5 // pred_check
        _
      $region10: #{tpu_custom_call.1} parent=5 // pred_check_branch
        %170 = sbr.rel (%p167) target = $region12
      $region11: #{tpu_custom_call.1} parent=5 // pred_region
        %s171 = ssub.s32 %s13, 1
        // Predicated region
        $region13: #{tpu_custom_call.1} parent=11 // pred_check
          %p172 = pneg %p77
        $region14: #{tpu_custom_call.1} parent=11 // pred_check_branch
          %174 = sbr.rel (%p172) target = $region16
        $region15: #{tpu_custom_call.1} parent=11 // pred_region
          %p175 = scmp.lt.s32.totalorder %s23, 0
          %s176 = scalar_select %p175, %s23, 0
          %s177 = smul.addr %s176, 4
          %s178 = scalar_lea.vmem %s1, %s177
        $region16: #{tpu_custom_call.1} parent=11 // pred_fallthru
          _
        // Predicated region
        $region17: #{tpu_custom_call.1} parent=11 // pred_check
          %p179 = pneg %p103
        $region18: #{tpu_custom_call.1} parent=11 // pred_check_branch
          %181 = sbr.rel (%p179) target = $region20
        $region19: #{tpu_custom_call.1} parent=11 // pred_region
          %p182 = scmp.lt.s32.totalorder %s23, 0
          %s183 = scalar_select %p182, %s23, 0
          %s184 = scalar_lea.vmem %s2, %s183
        $region20: #{tpu_custom_call.1} parent=11 // pred_fallthru
          _
        // Predicated region
        $region21: #{tpu_custom_call.1} parent=11 // pred_check
          %p185 = pneg %p129
        $region22: #{tpu_custom_call.1} parent=11 // pred_check_branch
          %187 = sbr.rel (%p185) target = $region24
        $region23: #{tpu_custom_call.1} parent=11 // pred_region
          %p188 = scmp.lt.s32.totalorder %s23, 0
          %s189 = scalar_select %p188, %s23, 0
          %s190 = scalar_lea.vmem %s3, %s189
        $region24: #{tpu_custom_call.1} parent=11 // pred_fallthru
          _
      $region12: #{tpu_custom_call.1} parent=5 // pred_fallthru
        _
      %p191 = scmp.lt.s32.totalorder %s13, 4
      // Predicated region
      $region25: #{tpu_custom_call.1} parent=5 // pred_check
        %p192 = pneg %p191
      $region26: #{tpu_custom_call.1} parent=5 // pred_check_branch
        %194 = sbr.rel (%p192) target = $region28
      $region27: #{tpu_custom_call.1} parent=5 // pred_region
        // Predicated region
        $region29: #{tpu_custom_call.1} parent=27 // pred_check
          %p195 = pneg %p45
        $region30: #{tpu_custom_call.1} parent=27 // pred_check_branch
          %197 = sbr.rel (%p195) target = $region32
        $region31: #{tpu_custom_call.1} parent=27 // pred_region
          %s198 = smul.u32 16, %s20
          %p199 = scmp.lt.s32.totalorder %s198, 63
          %s200 = scalar_select %p199, %s198, 63
          %s201 = smul.addr %s200, 2
          %s202 = smul.addr %s201, 4
          %s203 = scalar_lea.vmem %s0, %s202
          %s204 = smul.u32 16, %s20
        $region32: #{tpu_custom_call.1} parent=27 // pred_fallthru
          _
      $region28: #{tpu_custom_call.1} parent=5 // pred_fallthru
        _
      %p205 = scmp.le.s32.totalorder 1, %s13
      %p206 = scmp.lt.s32.totalorder %s13, 5
      %p207 = pnand %p205, %p206
      %p208 = pneg %p207
      // Predicated region
      $region33: #{tpu_custom_call.1} parent=5 // pred_check
        _
      $region34: #{tpu_custom_call.1} parent=5 // pred_check_branch
        %210 = sbr.rel (%p207) target = $region36
      $region35: #{tpu_custom_call.1} parent=5 // pred_region
        %s211 = ssub.s32 %s13, 1
        %s212 = smul.u32 16, %s22
        %p213 = scmp.lt.s32.totalorder %s212, 63
        %s214 = scalar_select %p213, %s212, 63
        %s215 = smul.addr %s214, 2
        %s216 = smul.addr %s215, 4
        %s217 = scalar_lea.vmem %s0, %s216
        %p218 = pneg %p51
        %p219 = pneg %p48
        %p220 = scmp.lt.s32.totalorder %s23, 0
        %s221 = scalar_select %p220, %s23, 0
        %s222 = smul.addr %s221, 4
        %s223 = scalar_lea.vmem %s1, %s222
        %p224 = pneg %p77
        %p225 = pneg %p74
        %p226 = scmp.lt.s32.totalorder %s23, 0
        %s227 = scalar_select %p226, %s23, 0
        %s228 = scalar_lea.vmem %s2, %s227
        %p229 = pneg %p103
        %p230 = pneg %p100
        %p231 = scmp.lt.s32.totalorder %s23, 0
        %s232 = scalar_select %p231, %s23, 0
        %s233 = scalar_lea.vmem %s3, %s232
        %p234 = pneg %p129
        %p235 = pneg %p126
        %p236 = pneg %p157
        %p237 = pneg %p154
        %s238 = sand.u32 %s144, 1
        %s239 = scalar_lea.sflag [#allocation3], %s238
        %s240 = sand.u32 %s144, 1
        %s241 = smul.addr %s240, 128
        %s242 = scalar_lea.vmem [#allocation2], %s241
        %s243 = smul.u32 16, %s22
        %p244 = scmp.lt.s32.totalorder %s243, 63
        %s245 = scalar_select %p244, %s243, 63
        %s246 = smul.addr %s245, 2
        %s247 = smul.addr %s246, 4
        %s248 = scalar_lea.vmem %s0, %s247
        %s249 = smul.u32 16, %s22
        %p250 = scmp.lt.s32.totalorder %s23, 0
        %s251 = scalar_select %p250, %s23, 0
        %s252 = smul.addr %s251, 4
        %s253 = scalar_lea.vmem %s1, %s252
        %p254 = scmp.lt.s32.totalorder %s23, 0
        %s255 = scalar_select %p254, %s23, 0
        %s256 = scalar_lea.vmem %s2, %s255
        %p257 = scmp.lt.s32.totalorder %s23, 0
        %s258 = scalar_select %p257, %s23, 0
        %s259 = scalar_lea.vmem %s3, %s258
        %s260 = smul.u32 16, %s22
        %v262 = vld [vmem:[%s248] sm:$0xff]
        %v263 = vld [vmem:[%s248 + $0x8] sm:$0xff]
        %v264 = vld [vmem:[%s248 + $0x10] sm:$0xff]
        %v265 = vld [vmem:[%s248 + $0x18] sm:$0xff]
        %v266 = vld [vmem:[%s248 + $0x20] sm:$0xff]
        %v267 = vld [vmem:[%s248 + $0x28] sm:$0xff]
        %v268 = vld [vmem:[%s248 + $0x30] sm:$0xff]
        %v269 = vld [vmem:[%s248 + $0x38] sm:$0xff]
        %v270 = vld [vmem:[%s248 + $0x40] sm:$0xff]
        %v271 = vld [vmem:[%s248 + $0x48] sm:$0xff]
        %v272 = vld [vmem:[%s248 + $0x50] sm:$0xff]
        %v273 = vld [vmem:[%s248 + $0x58] sm:$0xff]
        %v274 = vld [vmem:[%s248 + $0x60] sm:$0xff]
        %v275 = vld [vmem:[%s248 + $0x68] sm:$0xff]
        %v276 = vld [vmem:[%s248 + $0x70] sm:$0xff]
        %v277 = vld [vmem:[%s248 + $0x78] sm:$0xff]
        %v278 = vld [vmem:[%s253] sm:$0xf]
        %v279 = vld [vmem:[%s253 + $0x4] sm:$0xf]
        %v280 = vld [vmem:[%s253 + $0x8] sm:$0xf]
        %v281 = vld [vmem:[%s253 + $0xc] sm:$0xf]
        %v282 = vld [vmem:[%s253 + $0x10] sm:$0xf]
        %v283 = vld [vmem:[%s253 + $0x14] sm:$0xf]
        %v284 = vld [vmem:[%s253 + $0x18] sm:$0xf]
        %v285 = vld [vmem:[%s253 + $0x1c] sm:$0xf]
        %v286 = vld [vmem:[%s253 + $0x20] sm:$0xf]
        %v287 = vld [vmem:[%s253 + $0x24] sm:$0xf]
        %v288 = vld [vmem:[%s253 + $0x28] sm:$0xf]
        %v289 = vld [vmem:[%s253 + $0x2c] sm:$0xf]
        %v290 = vld [vmem:[%s253 + $0x30] sm:$0xf]
        %v291 = vld [vmem:[%s253 + $0x34] sm:$0xf]
        %v292 = vld [vmem:[%s253 + $0x38] sm:$0xf]
        %v293 = vld [vmem:[%s253 + $0x3c] sm:$0xf]
        %v294 = vld [vmem:[%s253 + $0x40] sm:$0xf]
        %v295 = vld [vmem:[%s253 + $0x44] sm:$0xf]
        %v296 = vld [vmem:[%s253 + $0x48] sm:$0x3]
        %v313 = vunpack.c.l.b16 %v262
        %v314 = vunpack.c.h.b16 %v262
        %v315 = vunpack.c.l.b16 %v263
        %v316 = vunpack.c.h.b16 %v263
        %v317 = vunpack.c.l.b16 %v264
        %v318 = vunpack.c.h.b16 %v264
        %v319 = vunpack.c.l.b16 %v265
        %v320 = vunpack.c.h.b16 %v265
        %v321 = vunpack.c.l.b16 %v266
        %v322 = vunpack.c.h.b16 %v266
        %v323 = vunpack.c.l.b16 %v267
        %v324 = vunpack.c.h.b16 %v267
        %v325 = vunpack.c.l.b16 %v268
        %v326 = vunpack.c.h.b16 %v268
        %v327 = vunpack.c.l.b16 %v269
        %v328 = vunpack.c.h.b16 %v269
        %v329 = vunpack.c.l.b16 %v270
        %v330 = vunpack.c.h.b16 %v270
        %v331 = vunpack.c.l.b16 %v271
        %v332 = vunpack.c.h.b16 %v271
        %v333 = vunpack.c.l.b16 %v272
        %v334 = vunpack.c.h.b16 %v272
        %v335 = vunpack.c.l.b16 %v273
        %v336 = vunpack.c.h.b16 %v273
        %v337 = vunpack.c.l.b16 %v274
        %v338 = vunpack.c.h.b16 %v274
        %v339 = vunpack.c.l.b16 %v275
        %v340 = vunpack.c.h.b16 %v275
        %v341 = vunpack.c.l.b16 %v276
        %v342 = vunpack.c.h.b16 %v276
        %v343 = vunpack.c.l.b16 %v277
        %v344 = vunpack.c.h.b16 %v277
        %v345 = vpack.c.b16 %v315, %v313
        %v346 = vpack.c.b16 %v316, %v314
        %v347 = vpack.c.b16 %v319, %v317
        %v348 = vpack.c.b16 %v320, %v318
        %v349 = vpack.c.b16 %v323, %v321
        %v350 = vpack.c.b16 %v324, %v322
        %v351 = vpack.c.b16 %v327, %v325
        %v352 = vpack.c.b16 %v328, %v326
        %v353 = vpack.c.b16 %v331, %v329
        %v354 = vpack.c.b16 %v332, %v330
        %v355 = vpack.c.b16 %v335, %v333
        %v356 = vpack.c.b16 %v336, %v334
        %v357 = vpack.c.b16 %v339, %v337
        %v358 = vpack.c.b16 %v340, %v338
        %v359 = vpack.c.b16 %v343, %v341
        %v360 = vpack.c.b16 %v344, %v342
        %v388 = vunpack.c.l.b16 %v278
        %v389 = vunpack.c.l.b16 %v279
        %v390 = vunpack.c.l.b16 %v280
        %v391 = vunpack.c.l.b16 %v281
        %v392 = vunpack.c.l.b16 %v282
        %v393 = vunpack.c.l.b16 %v283
        %v394 = vunpack.c.l.b16 %v284
        %v395 = vunpack.c.l.b16 %v285
        %v396 = vunpack.c.l.b16 %v286
        %v397 = vunpack.c.l.b16 %v287
        %v398 = vunpack.c.l.b16 %v288
        %v399 = vunpack.c.l.b16 %v289
        %v400 = vunpack.c.l.b16 %v290
        %v401 = vunpack.c.l.b16 %v291
        %v402 = vunpack.c.l.b16 %v292
        %v403 = vunpack.c.l.b16 %v293
        %v404 = vunpack.c.l.b16 %v294
        %v405 = vunpack.c.l.b16 %v295
        %v406 = vunpack.c.l.b16 %v296
        %v407 = vpack.c.b16 %v389, %v388
        %v408 = vpack.c.b16 %v391, %v390
        %v409 = vpack.c.b16 %v393, %v392
        %v410 = vpack.c.b16 %v395, %v394
        %v411 = vpack.c.b16 %v397, %v396
        %v412 = vpack.c.b16 %v399, %v398
        %v413 = vpack.c.b16 %v401, %v400
        %v414 = vpack.c.b16 %v403, %v402
        %v415 = vpack.c.b16 %v405, %v404
        %v416 = vpack.c.b16 %v406, %v406
        %vm426 = vcmask 154624
        %v428 = vsel %vm426, %v346, 0
        %v431 = vsel %vm426, %v348, 0
        %v434 = vsel %vm426, %v350, 0
        %v437 = vsel %vm426, %v352, 0
        %v440 = vsel %vm426, %v354, 0
        %v443 = vsel %vm426, %v356, 0
        %v446 = vsel %vm426, %v358, 0
        %v449 = vsel %vm426, %v360, 0
        %vm451 = vcmask 1040384
        %vm452 = vcmask 1041408
        %v453 = vsel %vm451, 4294967295, 65535
        %v454 = vsel %vm452, %v453, 0
        %v456 = vand.u32 %v416, %v454
        %458 = vmatprep.subr.bf16.mxu0 0
        %459 = vmatpush1.bf16.msra.mxu0 %v414
        %460 = vmatprep.subr.bf16.mxu0 0
        %461 = vmatpush1.bf16.msra.mxu0 %v413
        %462 = vmatprep.subr.bf16.mxu0 0
        %463 = vmatpush1.bf16.msra.mxu0 %v412
        %464 = vmatprep.subr.bf16.mxu0 0
        %465 = vmatpush1.bf16.msra.mxu0 %v411
        %466 = vmatprep.subr.bf16.mxu0 0
        %467 = vmatpush1.bf16.msra.mxu0 %v410
        %468 = vmatprep.subr.bf16.mxu0 0
        %469 = vmatpush1.bf16.msra.mxu0 %v409
        %470 = vmatprep.subr.bf16.mxu0 0
        %471 = vmatpush1.bf16.msra.mxu0 %v408
        %472 = vmatprep.subr.bf16.mxu0 0
        %473 = vmatpush1.bf16.msra.mxu0 %v407
        %474 = vmatprep.subr.bf16.mxu0 0
        %475 = vmatpush2.bf16.msra.mxu0 0
        %476 = vmatprep.subr.bf16.mxu0 0
        %477 = vmatpush2.bf16.msra.mxu0 0
        %478 = vmatprep.subr.bf16.mxu0 0
        %479 = vmatpush2.bf16.msra.mxu0 0
        %480 = vmatprep.subr.bf16.mxu0 0
        %481 = vmatpush2.bf16.msra.mxu0 0
        %482 = vmatprep.subr.bf16.mxu0 0
        %483 = vmatpush2.bf16.msra.mxu0 0
        %484 = vmatprep.subr.bf16.mxu0 0
        %485 = vmatpush2.bf16.msra.mxu0 0
        %486 = vmatprep.subr.bf16.mxu0 0
        %487 = vmatpush2.bf16.msra.mxu0 %v456
        %488 = vmatprep.subr.bf16.mxu0 0
        %489 = vmatpush2.bf16.msra.mxu0 %v415
        %490 = vmatprep.mubr.bf16.mxu0 %v428
        %491 = vmatmul.mubr.bf16.gmra.mxu0 %v345
        %v492 = vpop.f32.mrf.mxu0
        %v493 = vadd.f32 0.0, %v492
        %v494 = vpop.f32.mrf.mxu0
        %v495 = vpop.f32.mrf.mxu0
        %v496 = vadd.f32 0.0, %v495
        %v497 = vpop.f32.mrf.mxu0
        %498 = vmatprep.mubr.bf16.mxu0 %v431
        %499 = vmatmul.mubr.bf16.gmra.mxu0 %v347
        %v500 = vpop.f32.mrf.mxu0
        %v501 = vadd.f32 0.0, %v500
        %v502 = vpop.f32.mrf.mxu0
        %v503 = vpop.f32.mrf.mxu0
        %v504 = vadd.f32 0.0, %v503
        %v505 = vpop.f32.mrf.mxu0
        %506 = vmatprep.mubr.bf16.mxu0 %v434
        %507 = vmatmul.mubr.bf16.gmra.mxu0 %v349
        %v508 = vpop.f32.mrf.mxu0
        %v509 = vadd.f32 0.0, %v508
        %v510 = vpop.f32.mrf.mxu0
        %v511 = vpop.f32.mrf.mxu0
        %v512 = vadd.f32 0.0, %v511
        %v513 = vpop.f32.mrf.mxu0
        %514 = vmatprep.mubr.bf16.mxu0 %v437
        %515 = vmatmul.mubr.bf16.gmra.mxu0 %v351
        %v516 = vpop.f32.mrf.mxu0
        %v517 = vadd.f32 0.0, %v516
        %v518 = vpop.f32.mrf.mxu0
        %v519 = vpop.f32.mrf.mxu0
        %v520 = vadd.f32 0.0, %v519
        %v521 = vpop.f32.mrf.mxu0
        %522 = vmatprep.mubr.bf16.mxu0 %v440
        %523 = vmatmul.mubr.bf16.gmra.mxu0 %v353
        %v524 = vpop.f32.mrf.mxu0
        %v525 = vadd.f32 0.0, %v524
        %v526 = vpop.f32.mrf.mxu0
        %v527 = vpop.f32.mrf.mxu0
        %v528 = vadd.f32 0.0, %v527
        %v529 = vpop.f32.mrf.mxu0
        %530 = vmatprep.mubr.bf16.mxu0 %v443
        %531 = vmatmul.mubr.bf16.gmra.mxu0 %v355
        %v532 = vpop.f32.mrf.mxu0
        %v533 = vadd.f32 0.0, %v532
        %v534 = vpop.f32.mrf.mxu0
        %v535 = vpop.f32.mrf.mxu0
        %v536 = vadd.f32 0.0, %v535
        %v537 = vpop.f32.mrf.mxu0
        %538 = vmatprep.mubr.bf16.mxu0 %v446
        %539 = vmatmul.mubr.bf16.gmra.mxu0 %v357
        %v540 = vpop.f32.mrf.mxu0
        %v541 = vadd.f32 0.0, %v540
        %v542 = vpop.f32.mrf.mxu0
        %v543 = vpop.f32.mrf.mxu0
        %v544 = vadd.f32 0.0, %v543
        %v545 = vpop.f32.mrf.mxu0
        %546 = vmatprep.mubr.bf16.mxu0 %v449
        %547 = vmatmul.mubr.bf16.gmra.mxu0 %v359
        %v548 = vpop.f32.mrf.mxu0
        %v549 = vadd.f32 0.0, %v548
        %v550 = vpop.f32.mrf.mxu0
        %v551 = vpop.f32.mrf.mxu0
        %v552 = vadd.f32 0.0, %v551
        %v553 = vpop.f32.mrf.mxu0
        %554 = vdwg.mxu0
        %v555 = vld [vmem:[%s256] sm:$0x1]
        %v557 = vlaneseq
        %v558 = vshrl.u32 %v557, 7
        %v559 = vsub.s32 0, %v558
        %v560 = vrot.slane %v555, %v559
        %v562 = vmul.f32 %v493, %v560
        %v563 = vmul.f32 %v496, %v560
        %v564 = vmul.f32 %v501, %v560
        %v565 = vmul.f32 %v504, %v560
        %v566 = vmul.f32 %v509, %v560
        %v567 = vmul.f32 %v512, %v560
        %v568 = vmul.f32 %v517, %v560
        %v569 = vmul.f32 %v520, %v560
        %v570 = vmul.f32 %v525, %v560
        %v571 = vmul.f32 %v528, %v560
        %v572 = vmul.f32 %v533, %v560
        %v573 = vmul.f32 %v536, %v560
        %v574 = vmul.f32 %v541, %v560
        %v575 = vmul.f32 %v544, %v560
        %v576 = vmul.f32 %v549, %v560
        %v577 = vmul.f32 %v552, %v560
        %v578 = vld [vmem:[%s259] sm:$0x1]
        %v580 = vlaneseq
        %v581 = vshrl.u32 %v580, 7
        %v582 = vsub.s32 0, %v581
        %v583 = vrot.slane %v578, %v582
        %v585 = vadd.f32 %v562, %v583
        %v586 = vadd.f32 %v563, %v583
        %v587 = vadd.f32 %v564, %v583
        %v588 = vadd.f32 %v565, %v583
        %v589 = vadd.f32 %v566, %v583
        %v590 = vadd.f32 %v567, %v583
        %v591 = vadd.f32 %v568, %v583
        %v592 = vadd.f32 %v569, %v583
        %v593 = vadd.f32 %v570, %v583
        %v594 = vadd.f32 %v571, %v583
        %v595 = vadd.f32 %v572, %v583
        %v596 = vadd.f32 %v573, %v583
        %v597 = vadd.f32 %v574, %v583
        %v598 = vadd.f32 %v575, %v583
        %v599 = vadd.f32 %v576, %v583
        %v600 = vadd.f32 %v577, %v583
        %601 = vst [vmem:[%s242] sm:$0xff] %v585
        %602 = vst [vmem:[%s242 + $0x8] sm:$0xff] %v586
        %603 = vst [vmem:[%s242 + $0x10] sm:$0xff] %v587
        %604 = vst [vmem:[%s242 + $0x18] sm:$0xff] %v588
        %605 = vst [vmem:[%s242 + $0x20] sm:$0xff] %v589
        %606 = vst [vmem:[%s242 + $0x28] sm:$0xff] %v590
        %607 = vst [vmem:[%s242 + $0x30] sm:$0xff] %v591
        %608 = vst [vmem:[%s242 + $0x38] sm:$0xff] %v592
        %609 = vst [vmem:[%s242 + $0x40] sm:$0xff] %v593
        %610 = vst [vmem:[%s242 + $0x48] sm:$0xff] %v594
        %611 = vst [vmem:[%s242 + $0x50] sm:$0xff] %v595
        %612 = vst [vmem:[%s242 + $0x58] sm:$0xff] %v596
        %613 = vst [vmem:[%s242 + $0x60] sm:$0xff] %v597
        %614 = vst [vmem:[%s242 + $0x68] sm:$0xff] %v598
        %615 = vst [vmem:[%s242 + $0x70] sm:$0xff] %v599
        %616 = vst [vmem:[%s242 + $0x78] sm:$0xff] %v600
        %s617 = sand.u32 %s144, 1
        %s618 = scalar_lea.sflag [#allocation3], %s617
        %s619 = sand.u32 %s144, 1
        %s620 = smul.addr %s619, 128
        %s621 = scalar_lea.vmem [#allocation2], %s620
        // Predicated region
        $region37: #{tpu_custom_call.1} parent=35 // pred_check
          %p622 = pneg %p154
        $region38: #{tpu_custom_call.1} parent=35 // pred_check_branch
          %624 = sbr.rel (%p622) target = $region40
        $region39: #{tpu_custom_call.1} parent=35 // pred_region
          %s625 = smul.u32 16, %s22
          %s627 = ssub.s32 2048, 2048
          %628 = vsyncadd %s618, %s627
          %s629 = sadd.s32 %s23, %s625
          %s630 = smul.addr %s629, 128
          %s631 = scalar_lea.hbm %s4, %s630
          %s632 = sshll.u32 %s621, 4
          %s633 = int_to_ptr.vmem [resolvable:$true] %s632
          %638 = dma.vmem_to_hbm [thread:$0]  %s633, 2048, %s631, %s618, 128, 128, 8
        $region40: #{tpu_custom_call.1} parent=35 // pred_fallthru
          _
      $region36: #{tpu_custom_call.1} parent=5 // pred_fallthru
        _
      %p639 = scmp.le.s32.totalorder 2, %s13
      // Predicated region
      $region41: #{tpu_custom_call.1} parent=5 // pred_check
        %p640 = pneg %p639
      $region42: #{tpu_custom_call.1} parent=5 // pred_check_branch
        %642 = sbr.rel (%p640) target = $region44
      $region43: #{tpu_custom_call.1} parent=5 // pred_region
        %s643 = ssub.s32 %s13, 2
        // Predicated region
        $region45: #{tpu_custom_call.1} parent=43 // pred_check
          %p644 = pneg %p160
        $region46: #{tpu_custom_call.1} parent=43 // pred_check_branch
          %646 = sbr.rel (%p644) target = $region48
        $region47: #{tpu_custom_call.1} parent=43 // pred_region
          %s647 = sand.u32 %s145, 1
          %s648 = scalar_lea.sflag [#allocation3], %s647
          %s649 = sand.u32 %s145, 1
          %s650 = smul.addr %s649, 128
          %s651 = scalar_lea.vmem [#allocation2], %s650
          %652 = dma.done %s648, 2048
        $region48: #{tpu_custom_call.1} parent=43 // pred_fallthru
          _
      $region44: #{tpu_custom_call.1} parent=5 // pred_fallthru
        _
    $region6: #{tpu_custom_call.1} parent=1 // loop_footer
      %s17 = sadd.s32 1, %s13
    $region7: #{tpu_custom_call.1} parent=1 // loop_footer_branch
      %12 = sbr.rel target = $region3
    $region8: #{tpu_custom_call.1} parent=1 // loop_exit
      _
    %653 = vsyncpa [#allocation3], 1
    %s654 = scalar_lea.sflag [#allocation3], 1
    %655 = vsyncpa %s654, 1

</llo_original>
